<compile_context>
chip_gen: v5e
topology: v5e:2x2
jax: 0.10.0
libtpu: 0.0.40
codegen_flags: <defaults>
</compile_context>

<pallas_src>
import jax
import jax.numpy as jnp
from jax import lax
from jax.experimental import pallas as pl
from jax.experimental.pallas import tpu as pltpu


LANE = 128                      # pad every feature / class dim to this
TILE = 256                      # node-row and neighbor tile (multiple of 128)
VMEM_LIMIT = 32 * 1024 * 1024   # safe on v5e/v6e (128 MiB) and v7x (64 MiB)


def _round_up(x, m):
    return (x + m - 1) // m * m


def _pad2d(x, rows, cols):
    return jnp.pad(x, ((0, rows - x.shape[0]), (0, cols - x.shape[1])))


# --------------------------------------------------------------------------- #
# Kernel 1: dense feature transform  XW = X @ W   (used on the "transform-first"
# path, i.e. when fan_in > fan_out).  Row-tiled, W resident, bf16 in, bf16 out.
# --------------------------------------------------------------------------- #
def _xw_kernel(x_ref, w_ref, o_ref):
    o_ref[...] = jnp.dot(x_ref[...], w_ref[...],
                         preferred_element_type=jnp.float32).astype(o_ref.dtype)


def _transform(x_bf16, w_bf16, tm):
    n_pad, f_in = x_bf16.shape
    f_out = w_bf16.shape[1]
    flops = 2 * n_pad * f_in * f_out
    bytes_accessed = 2 * (n_pad * f_in + f_in * f_out + n_pad * f_out)
    return pl.pallas_call(
        _xw_kernel,
        out_shape=jax.ShapeDtypeStruct((n_pad, f_out), jnp.bfloat16),
        grid_spec=pltpu.PrefetchScalarGridSpec(
            num_scalar_prefetch=0,
            grid=(n_pad // tm,),
            in_specs=[pl.BlockSpec((tm, f_in), lambda i: (i, 0)),
                      pl.BlockSpec((f_in, f_out), lambda i: (0, 0))],
            out_specs=pl.BlockSpec((tm, f_out), lambda i: (i, 0)),
        ),
        compiler_params=pltpu.CompilerParams(
            dimension_semantics=("parallel",),
            vmem_limit_bytes=VMEM_LIMIT),
        cost_estimate=pl.CostEstimate(flops=int(flops), transcendentals=0,
                                      bytes_accessed=int(bytes_accessed)),
    )(x_bf16, w_bf16)


# --------------------------------------------------------------------------- #
# Kernel 2: neighbor aggregation with fused (optional) transform, bias and
# activation.  Per row tile i:
#     acc  = sum_k A_hat[i, k] @ Y[k]                 (bf16 x bf16 -> f32 on MXU)
#     z    = (acc @ W  if transform else acc) + b     (finalize only)
#     out  = activation(z)                            (relu / masked log_softmax)
# --------------------------------------------------------------------------- #
def _make_agg_kernel(transform, activation, num_valid_cols):
    def _finalize_math(acc, w_ref, b_ref):
        z = acc
        if transform:
            z = jnp.dot(z.astype(jnp.bfloat16), w_ref[...],
                        preferred_element_type=jnp.float32)
        z = z + b_ref[...]                      # bias folded into finalize only
        if activation == "relu":
            z = jnp.maximum(z, 0.0)
        elif activation == "log_softmax":
            # mask padded class lanes before the reductions
            col = lax.broadcasted_iota(jnp.int32, z.shape, 1)
            z = jnp.where(col < num_valid_cols, z, -jnp.inf)
            m = jnp.max(z, axis=-1, keepdims=True)
            s = z - m
            lse = jnp.log(jnp.sum(jnp.exp(s), axis=-1, keepdims=True))
            z = s - lse
        return z

    def _body(a_ref, y_ref, w_ref, b_ref, o_ref, acc_ref):
        k = pl.program_id(1)

        @pl.when(k == 0)
        def _init():
            acc_ref[...] = jnp.zeros_like(acc_ref)

        acc_ref[...] += jnp.dot(a_ref[...], y_ref[...],
                                preferred_element_type=jnp.float32)

        @pl.when(k == pl.num_programs(1) - 1)
        def _finalize():
            o_ref[...] = _finalize_math(acc_ref[...], w_ref, b_ref).astype(o_ref.dtype)

    if transform:
        def kernel(a_ref, y_ref, w_ref, b_ref, o_ref, acc_ref):
            _body(a_ref, y_ref, w_ref, b_ref, o_ref, acc_ref)
    else:
        def kernel(a_ref, y_ref, b_ref, o_ref, acc_ref):
            _body(a_ref, y_ref, None, b_ref, o_ref, acc_ref)
    return kernel


def _aggregate(a_bf16, y_bf16, w_bf16, b_f32, activation, num_valid_cols,
               out_dtype, tm, tk):
    n_pad = a_bf16.shape[0]
    y_width = y_bf16.shape[1]
    transform = w_bf16 is not None
    f_out = w_bf16.shape[1] if transform else y_width

    kernel = _make_agg_kernel(transform, activation, num_valid_cols)

    in_specs = [
        pl.BlockSpec((tm, tk), lambda i, k: (i, k)),        # A_hat tile
        pl.BlockSpec((tk, y_width), lambda i, k: (k, 0)),   # neighbor-row slab of Y
    ]
    operands = [a_bf16, y_bf16]
    if transform:
        in_specs.append(pl.BlockSpec((y_width, f_out), lambda i, k: (0, 0)))
        operands.append(w_bf16)
    in_specs.append(pl.BlockSpec((1, f_out), lambda i, k: (0, 0)))   # bias (f32)
    operands.append(b_f32)

    flops = 2 * n_pad * n_pad * y_width
    if transform:
        flops += 2 * n_pad * y_width * f_out
    transcendentals = n_pad * f_out if activation == "log_softmax" else 0
    bytes_accessed = (2 * n_pad * n_pad                       # A_hat (bf16)
                      + 2 * (n_pad // tm) * n_pad * y_width   # Y re-streamed per row tile
                      + 4 * n_pad * f_out)                    # output

    return pl.pallas_call(
        kernel,
        out_shape=jax.ShapeDtypeStruct((n_pad, f_out), out_dtype),
        grid_spec=pltpu.PrefetchScalarGridSpec(
            num_scalar_prefetch=0,
            grid=(n_pad // tm, n_pad // tk),                  # K (neighbors) last
            in_specs=in_specs,
            out_specs=pl.BlockSpec((tm, f_out), lambda i, k: (i, 0)),
            scratch_shapes=[pltpu.VMEM((tm, y_width), jnp.float32)],
        ),
        compiler_params=pltpu.CompilerParams(
            dimension_semantics=("parallel", "arbitrary"),
            vmem_limit_bytes=VMEM_LIMIT),
        cost_estimate=pl.CostEstimate(flops=int(flops),
                                      transcendentals=int(transcendentals),
                                      bytes_accessed=int(bytes_accessed)),
    )(*operands)


# --------------------------------------------------------------------------- #
# One GCNConv layer (+ fused activation), association chosen by fan_in/fan_out.
# --------------------------------------------------------------------------- #
def gcn_layer(a_pad_bf16, x_pad_bf16, w, b, activation, num_valid_out,
              out_dtype, tm, tk):
    f_in, f_out = w.shape
    f_in_pad = _round_up(f_in, LANE)
    f_out_pad = _round_up(f_out, LANE)
    w_pad = _pad2d(w, f_in_pad, f_out_pad).astype(jnp.bfloat16)
    b_pad = _pad2d(b.reshape(1, -1), 1, f_out_pad).astype(jnp.float32)

    if f_in > f_out:
        # transform-first: Y = X @ W (narrow), then aggregate A_hat @ Y + b
        y = _transform(x_pad_bf16, w_pad, tm)
        return _aggregate(a_pad_bf16, y, None, b_pad, activation,
                          num_valid_out, out_dtype, tm, tk)
    # aggregate-first: acc = A_hat @ X, then (acc @ W + b) at finalize
    return _aggregate(a_pad_bf16, x_pad_bf16, w_pad, b_pad, activation,
                      num_valid_out, out_dtype, tm, tk)


def gcn_net_forward(a_hat, x, w1, b1, w2, b2, *, tile=TILE):
    n = x.shape[0]
    c = w2.shape[1]
    n_pad = _round_up(n, tile)
    f_pad = _round_up(x.shape[1], LANE)

    a_p = _pad2d(a_hat, n_pad, n_pad).astype(jnp.bfloat16)
    x_p = _pad2d(x, n_pad, f_pad).astype(jnp.bfloat16)

    # GCNConv1 + ReLU (H stays 128-lane-padded bf16 for the next layer)
    h = gcn_layer(a_p, x_p, w1, b1, activation="relu",
                  num_valid_out=w1.shape[1], out_dtype=jnp.bfloat16,
                  tm=tile, tk=tile)
    # TODO(synk): training-mode dropout (pltpu.prng_random_bits mask) not implemented;
    #             F.dropout is identity in eval mode, which is what we match here.
    # GCNConv2 + masked log_softmax over the class axis
    out_p = gcn_layer(a_p, h, w2, b2, activation="log_softmax",
                      num_valid_out=c, out_dtype=jnp.float32,
                      tm=tile, tk=tile)
    return out_p[:n, :c]


# --------------------------------------------------------------------------- #
# Plain-JAX glue: adjacency normalization, init, reference.
# --------------------------------------------------------------------------- #
def gcn_norm_dense(edge_index, num_nodes):
    """Dense PyG gcn_norm: A_hat = D^-1/2 (A + I) D^-1/2 (scatter-add for dup edges)."""
    src, dst = edge_index[0], edge_index[1]
    adj = jnp.zeros((num_nodes, num_nodes), jnp.float32)
    adj = adj.at[dst, src].add(1.0)            # row = target, col = source
    adj = adj + jnp.eye(num_nodes, dtype=jnp.float32)
    deg = adj.sum(axis=1)
    dinv = jnp.where(deg > 0, 1.0 / jnp.sqrt(deg), 0.0)
    return dinv[:, None] * adj * dinv[None, :]


def glorot(key, shape):
    fan_in, fan_out = shape
    limit = jnp.sqrt(6.0 / (fan_in + fan_out))
    return jax.random.uniform(key, shape, jnp.float32, -limit, limit)


def reference_forward(a_hat, x, w1, b1, w2, b2):
    """Plain-JAX reference mirroring the kernel's bf16-operand / f32-accum math."""
    a = a_hat.astype(jnp.bfloat16)
    xb = x.astype(jnp.bfloat16)
    w1b = w1.astype(jnp.bfloat16)
    w2b = w2.astype(jnp.bfloat16)
    # layer 1: fan_in(16) <= fan_out(32) -> aggregate-first  (A @ X) @ W1 + b1
    ax = jnp.dot(a, xb, preferred_element_type=jnp.float32)
    z1 = jnp.dot(ax.astype(jnp.bfloat16), w1b,
                 preferred_element_type=jnp.float32) + b1[None, :]
    h = jnp.maximum(z1, 0.0).astype(jnp.bfloat16)
    # layer 2: fan_in(32) > fan_out(8) -> transform-first  A @ (H @ W2) + b2
    hw = jnp.dot(h, w2b, preferred_element_type=jnp.float32).astype(jnp.bfloat16)
    z2 = jnp.dot(a, hw, preferred_element_type=jnp.float32) + b2[None, :]
    return jax.nn.log_softmax(z2, axis=1)


if __name__ == "__main__":
    # small synthetic "Cora-like" graph
    N = 32        # nodes
    FEATS = 16    # input features
    HIDDEN = 32   # hidden dim
    CLASSES = 8   # output classes

    key = jax.random.PRNGKey(0)
    k_x, k_e, k_w1, k_w2, k_b1, k_b2 = jax.random.split(key, 6)

    x = jax.random.normal(k_x, (N, FEATS), jnp.float32)

    # deterministic undirected edge_index: a ring plus a few chords
    ring_src = jnp.arange(N)
    ring_dst = (jnp.arange(N) + 1) % N
    chord_src = jax.random.randint(k_e, (16,), 0, N)
    chord_dst = (chord_src + 7) % N
    src = jnp.concatenate([ring_src, ring_dst, chord_src, chord_dst])
    dst = jnp.concatenate([ring_dst, ring_src, chord_dst, chord_src])
    edge_index = jnp.stack([src, dst], axis=0)      # [2, E]

    # parameters (PyG GCNConv shapes; nonzero biases to exercise the bias path)
    w1 = glorot(k_w1, (FEATS, HIDDEN))
    b1 = 0.1 * jax.random.normal(k_b1, (HIDDEN,), jnp.float32)
    w2 = glorot(k_w2, (HIDDEN, CLASSES))
    b2 = 0.1 * jax.random.normal(k_b2, (CLASSES,), jnp.float32)

    a_hat = gcn_norm_dense(edge_index, N)

    out = jax.block_until_ready(gcn_net_forward(a_hat, x, w1, b1, w2, b2))

    ref = reference_forward(a_hat, x, w1, b1, w2, b2)
    assert out.shape == (N, CLASSES)
    err = float(jnp.max(jnp.abs(out - ref)))
    assert bool(jnp.allclose(out, ref, atol=5e-4, rtol=5e-4)), f"max err {err}"

    print("KERNEL_OK")
</pallas_src>

<mosaic_0001>
module attributes {stable_mosaic.version = 11 : i64} {
  func.func @kernel(%arg0: i32, %arg1: i32, %arg2: memref<256x256xbf16, #tpu.memory_space<vmem>>, %arg3: memref<256x128xbf16, #tpu.memory_space<vmem>>, %arg4: memref<128x128xbf16, #tpu.memory_space<vmem>>, %arg5: memref<1x128xf32, #tpu.memory_space<vmem>>, %arg6: memref<256x128xbf16, #tpu.memory_space<vmem>>, %arg7: memref<256x128xf32, #tpu.memory_space<vmem>>) attributes {dimension_semantics = [#tpu.dimension_semantics<parallel>, #tpu.dimension_semantics<arbitrary>], iteration_bounds = array<i64: 1, 1>, scalar_prefetch = 0 : i64, scratch_operands = 1 : i64, tpu.core_type = #tpu.core_type<tc>, window_params = [{transform_indices = @transform_0, window_bounds = array<i64: 256, 256>}, {transform_indices = @transform_1, window_bounds = array<i64: 256, 128>}, {pipeline_mode = #tpu.pipeline_mode<synchronous>, transform_indices = @transform_2, window_bounds = array<i64: 128, 128>}, {pipeline_mode = #tpu.pipeline_mode<synchronous>, transform_indices = @transform_3, window_bounds = array<i64: 1, 128>}, {transform_indices = @transform_4, window_bounds = array<i64: 256, 128>}]} {
    %c0_i32 = arith.constant 0 : i32
    %0 = arith.cmpi eq, %arg1, %c0_i32 : i32
    %1 = arith.extui %0 : i1 to i32
    %c0_i32_0 = arith.constant 0 : i32
    %2 = arith.cmpi ne, %1, %c0_i32_0 : i32
    scf.if %2 {
      %cst_10 = arith.constant 0.000000e+00 : f32
      %12 = vector.broadcast %cst_10 : f32 to vector<256x128xf32>
      %c0_11 = arith.constant 0 : index
      %c0_12 = arith.constant 0 : index
      %13 = vector.load %arg7[%c0_11, %c0_12] : memref<256x128xf32, #tpu.memory_space<vmem>>, vector<256x128xf32>
      tpu.vector_store %arg7[%c0_11, %c0_12], %12 {strides = array<i32>} : memref<256x128xf32, #tpu.memory_space<vmem>>, vector<256x128xf32>,
    } else {
    }
    %c0 = arith.constant 0 : index
    %c0_1 = arith.constant 0 : index
    %3 = vector.load %arg7[%c0, %c0_1] : memref<256x128xf32, #tpu.memory_space<vmem>>, vector<256x128xf32>
    %c0_2 = arith.constant 0 : index
    %c0_3 = arith.constant 0 : index
    %4 = vector.load %arg2[%c0_2, %c0_3] : memref<256x256xbf16, #tpu.memory_space<vmem>>, vector<256x256xbf16>
    %c0_4 = arith.constant 0 : index
    %c0_5 = arith.constant 0 : index
    %5 = vector.load %arg3[%c0_4, %c0_5] : memref<256x128xbf16, #tpu.memory_space<vmem>>, vector<256x128xbf16>
    %cst = arith.constant dense<0.000000e+00> : vector<256x128xf32>
    %6 = tpu.matmul %4, %5, %cst {dimension_numbers = #tpu.dot_dimension_numbers<[1], [0], [0], [1], [0, 0, 1, 1], [], []>} : vector<256x256xbf16>, vector<256x128xbf16>, vector<256x128xf32> -> vector<256x128xf32>
    %7 = arith.addf %3, %6 : vector<256x128xf32>
    %c0_6 = arith.constant 0 : index
    %c0_7 = arith.constant 0 : index
    %8 = vector.load %arg7[%c0_6, %c0_7] : memref<256x128xf32, #tpu.memory_space<vmem>>, vector<256x128xf32>
    tpu.vector_store %arg7[%c0_6, %c0_7], %7 {strides = array<i32>} : memref<256x128xf32, #tpu.memory_space<vmem>>, vector<256x128xf32>,
    %c0_i32_8 = arith.constant 0 : i32
    %9 = arith.cmpi eq, %arg1, %c0_i32_8 : i32
    %10 = arith.extui %9 : i1 to i32
    %c0_i32_9 = arith.constant 0 : i32
    %11 = arith.cmpi ne, %10, %c0_i32_9 : i32
    scf.if %11 {
      %c0_10 = arith.constant 0 : index
      %c0_11 = arith.constant 0 : index
      %12 = vector.load %arg7[%c0_10, %c0_11] : memref<256x128xf32, #tpu.memory_space<vmem>>, vector<256x128xf32>
      %13 = arith.truncf %12 : vector<256x128xf32> to vector<256x128xbf16>
      %c0_12 = arith.constant 0 : index
      %c0_13 = arith.constant 0 : index
      %14 = vector.load %arg4[%c0_12, %c0_13] : memref<128x128xbf16, #tpu.memory_space<vmem>>, vector<128x128xbf16>
      %cst_14 = arith.constant dense<0.000000e+00> : vector<256x128xf32>
      %15 = tpu.matmul %13, %14, %cst_14 {dimension_numbers = #tpu.dot_dimension_numbers<[1], [0], [0], [1], [0, 0, 1, 1], [], []>} : vector<256x128xbf16>, vector<128x128xbf16>, vector<256x128xf32> -> vector<256x128xf32>
      %c0_15 = arith.constant 0 : index
      %c0_16 = arith.constant 0 : index
      %16 = vector.load %arg5[%c0_15, %c0_16] : memref<1x128xf32, #tpu.memory_space<vmem>>, vector<1x128xf32>
      %17 = vector.broadcast %16 : vector<1x128xf32> to vector<256x128xf32>
      %18 = arith.addf %15, %17 : vector<256x128xf32>
      %cst_17 = arith.constant 0.000000e+00 : f32
      %19 = vector.broadcast %cst_17 : f32 to vector<256x128xf32>
      %20 = arith.maximumf %18, %19 : vector<256x128xf32>
      %21 = arith.truncf %20 : vector<256x128xf32> to vector<256x128xbf16>
      %c0_18 = arith.constant 0 : index
      %c0_19 = arith.constant 0 : index
      %22 = vector.load %arg6[%c0_18, %c0_19] : memref<256x128xbf16, #tpu.memory_space<vmem>>, vector<256x128xbf16>
      tpu.vector_store %arg6[%c0_18, %c0_19], %21 {strides = array<i32>} : memref<256x128xbf16, #tpu.memory_space<vmem>>, vector<256x128xbf16>,
    } else {
    }
    return
  }
  func.func @transform_0(%arg0: i32, %arg1: i32) -> (i32, i32) {
    %c0_i32 = arith.constant 0 : i32
    return %arg0, %arg1 : i32, i32
  }
  func.func @transform_1(%arg0: i32, %arg1: i32) -> (i32, i32) {
    %c0_i32 = arith.constant 0 : i32
    %c0_i32_0 = arith.constant 0 : i32
    return %arg1, %c0_i32 : i32, i32
  }
  func.func @transform_2(%arg0: i32, %arg1: i32) -> (i32, i32) {
    %c0_i32 = arith.constant 0 : i32
    %c0_i32_0 = arith.constant 0 : i32
    %c0_i32_1 = arith.constant 0 : i32
    return %c0_i32, %c0_i32_0 : i32, i32
  }
  func.func @transform_3(%arg0: i32, %arg1: i32) -> (i32, i32) {
    %c0_i32 = arith.constant 0 : i32
    %c0_i32_0 = arith.constant 0 : i32
    %c0_i32_1 = arith.constant 0 : i32
    return %c0_i32, %c0_i32_0 : i32, i32
  }
  func.func @transform_4(%arg0: i32, %arg1: i32) -> (i32, i32) {
    %c0_i32 = arith.constant 0 : i32
    %c0_i32_0 = arith.constant 0 : i32
    return %arg0, %c0_i32 : i32, i32
  }
}

</mosaic_0001>

<llo_original>
// kernel: tpu_custom_call.1
$region0: #{tpu_custom_call.1}
  #allocation0 [shape = 'u32[]', space=smem, size = 0x4, offset = 0x4, fixed_abs, tag = 'smem constant byte address 0x4 - core index']
  #allocation1 [shape = 'u32[72,128]{1,0:T(1,128)}', space=vmem, size = 0x9000, scoped, tag = 'internal scratch']
  #allocation2 [shape = 'f32[256,128]{1,0:T(8,128)}', space=vmem, size = 0x20000, scoped, tag = 'scratch operand']
  %s0 = inlined_call_operand.hbm [shape: bf16[256,256], index: 0, kind: input, shape index: {}]
  %s1 = inlined_call_operand.hbm [shape: bf16[256,128], index: 1, kind: input, shape index: {}]
  %s2 = inlined_call_operand.hbm [shape: bf16[128,128], index: 2, kind: input, shape index: {}]
  %s3 = inlined_call_operand.vmem [shape: f32[1,128], index: 3, kind: input, shape index: {}]
  %s4 = inlined_call_operand.hbm [shape: bf16[256,128], index: 4, kind: output, shape index: {}]
  %s5 = sld [smem:[#allocation0]]
  $region46: #{tpu_custom_call.1} parent=0
    _
  %s7 = ssub.s32 1, %s5
  %s8 = scalar_select 0, %s7, %s5
  $region1: #{tpu_custom_call.1} parent=0
    #allocation3 [shape = 'u8[131072]{0}', space=vmem, size = 0x20000, scoped, tag = 'input window, operand 0, single buffered']
    #allocation4 [shape = 's32[1]{0}', space=sflag, size = 0x4, scoped, tag = 'scoped memory for tpu_custom_call.1']
    #allocation5 [shape = 's32[1]{0}', space=sflag, size = 0x4, scoped, tag = 'scoped memory for tpu_custom_call.1']
    #allocation6 [shape = 'u8[65536]{0}', space=vmem, size = 0x10000, scoped, tag = 'input window, operand 1, single buffered']
    #allocation7 [shape = 's32[1]{0}', space=sflag, size = 0x4, scoped, tag = 'scoped memory for tpu_custom_call.1']
    #allocation8 [shape = 'u8[32768]{0}', space=vmem, size = 0x8000, scoped, tag = 'input window, operand 2, single buffered']
    #allocation9 [shape = 'u8[65536]{0}', space=vmem, size = 0x10000, scoped, tag = 'output window, operand 0, single buffered']
    %9 = vsyncpa [#allocation4], 0
    %10 = vsyncpa [#allocation7], 0
    %11 = vsyncpa [#allocation5], 0
    // Predicated region
    $region2: #{tpu_custom_call.1} parent=1 // pred_check
      _
    $region3: #{tpu_custom_call.1} parent=1 // pred_check_branch
      %13 = sbr.rel (0) target = $region5
    $region4: #{tpu_custom_call.1} parent=1 // pred_region
      %15 = vsyncadd [#allocation4], 0
      %s16 = sshll.u32 %s0, 4
      %s17 = int_to_ptr.hbm [resolvable:$true] %s16
      %s18 = sshll.u32 [#allocation3], 4
      %s19 = int_to_ptr.vmem [resolvable:$true] %s18
      %24 = dma.hbm_to_vmem [thread:$0]  %s17, 4096, %s19, [#allocation4], 128, 128, 8
    $region5: #{tpu_custom_call.1} parent=1 // pred_fallthru
      _
    // Predicated region
    $region6: #{tpu_custom_call.1} parent=1 // pred_check
      _
    $region7: #{tpu_custom_call.1} parent=1 // pred_check_branch
      %26 = sbr.rel (0) target = $region9
    $region8: #{tpu_custom_call.1} parent=1 // pred_region
      %28 = vsyncadd [#allocation7], 0
      %s29 = sshll.u32 %s1, 4
      %s30 = int_to_ptr.hbm [resolvable:$true] %s29
      %s31 = sshll.u32 [#allocation6], 4
      %s32 = int_to_ptr.vmem [resolvable:$true] %s31
      %37 = dma.hbm_to_vmem [thread:$0]  %s30, 2048, %s32, [#allocation7], 64, 64, 4
    $region9: #{tpu_custom_call.1} parent=1 // pred_fallthru
      _
    // Predicated region
    $region10: #{tpu_custom_call.1} parent=1 // pred_check
      _
    $region11: #{tpu_custom_call.1} parent=1 // pred_check_branch
      %39 = sbr.rel (0) target = $region13
    $region12: #{tpu_custom_call.1} parent=1 // pred_region
      %41 = vsyncadd [#allocation7], 0
      %s42 = sshll.u32 %s2, 4
      %s43 = int_to_ptr.hbm [resolvable:$true] %s42
      %s44 = sshll.u32 [#allocation8], 4
      %s45 = int_to_ptr.vmem [resolvable:$true] %s44
      %50 = dma.hbm_to_vmem [thread:$0]  %s43, 1024, %s45, [#allocation7], 64, 64, 4
    $region13: #{tpu_custom_call.1} parent=1 // pred_fallthru
      _
    // Predicated region
    $region14: #{tpu_custom_call.1} parent=1 // pred_check
      _
    $region15: #{tpu_custom_call.1} parent=1 // pred_check_branch
      %52 = sbr.rel (0) target = $region17
    $region16: #{tpu_custom_call.1} parent=1 // pred_region
      _
    $region17: #{tpu_custom_call.1} parent=1 // pred_fallthru
      _
    // Predicated region
    $region18: #{tpu_custom_call.1} parent=1 // pred_check
      _
    $region19: #{tpu_custom_call.1} parent=1 // pred_check_branch
      %54 = sbr.rel (0) target = $region21
    $region20: #{tpu_custom_call.1} parent=1 // pred_region
      %56 = dma.done [#allocation4], 4096
    $region21: #{tpu_custom_call.1} parent=1 // pred_fallthru
      _
    // Predicated region
    $region22: #{tpu_custom_call.1} parent=1 // pred_check
      _
    $region23: #{tpu_custom_call.1} parent=1 // pred_check_branch
      %58 = sbr.rel (0) target = $region25
    $region24: #{tpu_custom_call.1} parent=1 // pred_region
      %60 = dma.done [#allocation7], 2048
    $region25: #{tpu_custom_call.1} parent=1 // pred_fallthru
      _
    // Predicated region
    $region26: #{tpu_custom_call.1} parent=1 // pred_check
      _
    $region27: #{tpu_custom_call.1} parent=1 // pred_check_branch
      %62 = sbr.rel (0) target = $region29
    $region28: #{tpu_custom_call.1} parent=1 // pred_region
      %64 = dma.done [#allocation7], 1024
    $region29: #{tpu_custom_call.1} parent=1 // pred_fallthru
      _
    %p65 = scmp.eq.s32.totalorder 0, 0
    // Predicated region
    $region30: #{tpu_custom_call.1} parent=1 // pred_check
      %p66 = pneg %p65
    $region31: #{tpu_custom_call.1} parent=1 // pred_check_branch
      %68 = sbr.rel (%p66) target = $region33
    $region32: #{tpu_custom_call.1} parent=1 // pred_region
      %69 = vst [vmem:[#allocation2] sm:$0xff] 0.0
      %70 = vst [vmem:[#allocation2 + $0x8] sm:$0xff] 0.0
      %71 = vst [vmem:[#allocation2 + $0x10] sm:$0xff] 0.0
      %72 = vst [vmem:[#allocation2 + $0x18] sm:$0xff] 0.0
      %73 = vst [vmem:[#allocation2 + $0x20] sm:$0xff] 0.0
      %74 = vst [vmem:[#allocation2 + $0x28] sm:$0xff] 0.0
      %75 = vst [vmem:[#allocation2 + $0x30] sm:$0xff] 0.0
      %76 = vst [vmem:[#allocation2 + $0x38] sm:$0xff] 0.0
      %77 = vst [vmem:[#allocation2 + $0x40] sm:$0xff] 0.0
      %78 = vst [vmem:[#allocation2 + $0x48] sm:$0xff] 0.0
      %79 = vst [vmem:[#allocation2 + $0x50] sm:$0xff] 0.0
      %80 = vst [vmem:[#allocation2 + $0x58] sm:$0xff] 0.0
      %81 = vst [vmem:[#allocation2 + $0x60] sm:$0xff] 0.0
      %82 = vst [vmem:[#allocation2 + $0x68] sm:$0xff] 0.0
      %83 = vst [vmem:[#allocation2 + $0x70] sm:$0xff] 0.0
      %84 = vst [vmem:[#allocation2 + $0x78] sm:$0xff] 0.0
      %85 = vst [vmem:[#allocation2 + $0x80] sm:$0xff] 0.0
      %86 = vst [vmem:[#allocation2 + $0x88] sm:$0xff] 0.0
      %87 = vst [vmem:[#allocation2 + $0x90] sm:$0xff] 0.0
      %88 = vst [vmem:[#allocation2 + $0x98] sm:$0xff] 0.0
      %89 = vst [vmem:[#allocation2 + $0xa0] sm:$0xff] 0.0
      %90 = vst [vmem:[#allocation2 + $0xa8] sm:$0xff] 0.0
      %91 = vst [vmem:[#allocation2 + $0xb0] sm:$0xff] 0.0
      %92 = vst [vmem:[#allocation2 + $0xb8] sm:$0xff] 0.0
      %93 = vst [vmem:[#allocation2 + $0xc0] sm:$0xff] 0.0
      %94 = vst [vmem:[#allocation2 + $0xc8] sm:$0xff] 0.0
      %95 = vst [vmem:[#allocation2 + $0xd0] sm:$0xff] 0.0
      %96 = vst [vmem:[#allocation2 + $0xd8] sm:$0xff] 0.0
      %97 = vst [vmem:[#allocation2 + $0xe0] sm:$0xff] 0.0
      %98 = vst [vmem:[#allocation2 + $0xe8] sm:$0xff] 0.0
      %99 = vst [vmem:[#allocation2 + $0xf0] sm:$0xff] 0.0
      %100 = vst [vmem:[#allocation2 + $0xf8] sm:$0xff] 0.0
    $region33: #{tpu_custom_call.1} parent=1 // pred_fallthru
      _
    %v101 = vld [vmem:[#allocation2] sm:$0xff]
    %v102 = vld [vmem:[#allocation2 + $0x8] sm:$0xff]
    %v103 = vld [vmem:[#allocation2 + $0x10] sm:$0xff]
    %v104 = vld [vmem:[#allocation2 + $0x18] sm:$0xff]
    %v105 = vld [vmem:[#allocation2 + $0x20] sm:$0xff]
    %v106 = vld [vmem:[#allocation2 + $0x28] sm:$0xff]
    %v107 = vld [vmem:[#allocation2 + $0x30] sm:$0xff]
    %v108 = vld [vmem:[#allocation2 + $0x38] sm:$0xff]
    %v109 = vld [vmem:[#allocation2 + $0x40] sm:$0xff]
    %v110 = vld [vmem:[#allocation2 + $0x48] sm:$0xff]
    %v111 = vld [vmem:[#allocation2 + $0x50] sm:$0xff]
    %v112 = vld [vmem:[#allocation2 + $0x58] sm:$0xff]
    %v113 = vld [vmem:[#allocation2 + $0x60] sm:$0xff]
    %v114 = vld [vmem:[#allocation2 + $0x68] sm:$0xff]
    %v115 = vld [vmem:[#allocation2 + $0x70] sm:$0xff]
    %v116 = vld [vmem:[#allocation2 + $0x78] sm:$0xff]
    %v117 = vld [vmem:[#allocation2 + $0x80] sm:$0xff]
    %v118 = vld [vmem:[#allocation2 + $0x88] sm:$0xff]
    %v119 = vld [vmem:[#allocation2 + $0x90] sm:$0xff]
    %v120 = vld [vmem:[#allocation2 + $0x98] sm:$0xff]
    %v121 = vld [vmem:[#allocation2 + $0xa0] sm:$0xff]
    %v122 = vld [vmem:[#allocation2 + $0xa8] sm:$0xff]
    %v123 = vld [vmem:[#allocation2 + $0xb0] sm:$0xff]
    %v124 = vld [vmem:[#allocation2 + $0xb8] sm:$0xff]
    %v125 = vld [vmem:[#allocation2 + $0xc0] sm:$0xff]
    %v126 = vld [vmem:[#allocation2 + $0xc8] sm:$0xff]
    %v127 = vld [vmem:[#allocation2 + $0xd0] sm:$0xff]
    %v128 = vld [vmem:[#allocation2 + $0xd8] sm:$0xff]
    %v129 = vld [vmem:[#allocation2 + $0xe0] sm:$0xff]
    %v130 = vld [vmem:[#allocation2 + $0xe8] sm:$0xff]
    %v131 = vld [vmem:[#allocation2 + $0xf0] sm:$0xff]
    %v132 = vld [vmem:[#allocation2 + $0xf8] sm:$0xff]
    %v133 = vld [vmem:[#allocation3] sm:$0xff]
    %v134 = vld [vmem:[#allocation3 + $0x8] sm:$0xff]
    %v135 = vld [vmem:[#allocation3 + $0x10] sm:$0xff]
    %v136 = vld [vmem:[#allocation3 + $0x18] sm:$0xff]
    %v137 = vld [vmem:[#allocation3 + $0x20] sm:$0xff]
    %v138 = vld [vmem:[#allocation3 + $0x28] sm:$0xff]
    %v139 = vld [vmem:[#allocation3 + $0x30] sm:$0xff]
    %v140 = vld [vmem:[#allocation3 + $0x38] sm:$0xff]
    %v141 = vld [vmem:[#allocation3 + $0x40] sm:$0xff]
    %v142 = vld [vmem:[#allocation3 + $0x48] sm:$0xff]
    %v143 = vld [vmem:[#allocation3 + $0x50] sm:$0xff]
    %v144 = vld [vmem:[#allocation3 + $0x58] sm:$0xff]
    %v145 = vld [vmem:[#allocation3 + $0x60] sm:$0xff]
    %v146 = vld [vmem:[#allocation3 + $0x68] sm:$0xff]
    %v147 = vld [vmem:[#allocation3 + $0x70] sm:$0xff]
    %v148 = vld [vmem:[#allocation3 + $0x78] sm:$0xff]
    %v149 = vld [vmem:[#allocation3 + $0x80] sm:$0xff]
    %v150 = vld [vmem:[#allocation3 + $0x88] sm:$0xff]
    %v151 = vld [vmem:[#allocation3 + $0x90] sm:$0xff]
    %v152 = vld [vmem:[#allocation3 + $0x98] sm:$0xff]
    %v153 = vld [vmem:[#allocation3 + $0xa0] sm:$0xff]
    %v154 = vld [vmem:[#allocation3 + $0xa8] sm:$0xff]
    %v155 = vld [vmem:[#allocation3 + $0xb0] sm:$0xff]
    %v156 = vld [vmem:[#allocation3 + $0xb8] sm:$0xff]
    %v157 = vld [vmem:[#allocation3 + $0xc0] sm:$0xff]
    %v158 = vld [vmem:[#allocation3 + $0xc8] sm:$0xff]
    %v159 = vld [vmem:[#allocation3 + $0xd0] sm:$0xff]
    %v160 = vld [vmem:[#allocation3 + $0xd8] sm:$0xff]
    %v161 = vld [vmem:[#allocation3 + $0xe0] sm:$0xff]
    %v162 = vld [vmem:[#allocation3 + $0xe8] sm:$0xff]
    %v163 = vld [vmem:[#allocation3 + $0xf0] sm:$0xff]
    %v164 = vld [vmem:[#allocation3 + $0xf8] sm:$0xff]
    %v165 = vld [vmem:[#allocation6] sm:$0xf]
    %v166 = vld [vmem:[#allocation6 + $0x4] sm:$0xf]
    %v167 = vld [vmem:[#allocation6 + $0x8] sm:$0xf]
    %v168 = vld [vmem:[#allocation6 + $0xc] sm:$0xf]
    %v169 = vld [vmem:[#allocation6 + $0x10] sm:$0xf]
    %v170 = vld [vmem:[#allocation6 + $0x14] sm:$0xf]
    %v171 = vld [vmem:[#allocation6 + $0x18] sm:$0xf]
    %v172 = vld [vmem:[#allocation6 + $0x1c] sm:$0xf]
    %v173 = vld [vmem:[#allocation6 + $0x20] sm:$0xf]
    %v174 = vld [vmem:[#allocation6 + $0x24] sm:$0xf]
    %v175 = vld [vmem:[#allocation6 + $0x28] sm:$0xf]
    %v176 = vld [vmem:[#allocation6 + $0x2c] sm:$0xf]
    %v177 = vld [vmem:[#allocation6 + $0x30] sm:$0xf]
    %v178 = vld [vmem:[#allocation6 + $0x34] sm:$0xf]
    %v179 = vld [vmem:[#allocation6 + $0x38] sm:$0xf]
    %v180 = vld [vmem:[#allocation6 + $0x3c] sm:$0xf]
    %v181 = vld [vmem:[#allocation6 + $0x40] sm:$0xf]
    %v182 = vld [vmem:[#allocation6 + $0x44] sm:$0xf]
    %v183 = vld [vmem:[#allocation6 + $0x48] sm:$0xf]
    %v184 = vld [vmem:[#allocation6 + $0x4c] sm:$0xf]
    %v185 = vld [vmem:[#allocation6 + $0x50] sm:$0xf]
    %v186 = vld [vmem:[#allocation6 + $0x54] sm:$0xf]
    %v187 = vld [vmem:[#allocation6 + $0x58] sm:$0xf]
    %v188 = vld [vmem:[#allocation6 + $0x5c] sm:$0xf]
    %v189 = vld [vmem:[#allocation6 + $0x60] sm:$0xf]
    %v190 = vld [vmem:[#allocation6 + $0x64] sm:$0xf]
    %v191 = vld [vmem:[#allocation6 + $0x68] sm:$0xf]
    %v192 = vld [vmem:[#allocation6 + $0x6c] sm:$0xf]
    %v193 = vld [vmem:[#allocation6 + $0x70] sm:$0xf]
    %v194 = vld [vmem:[#allocation6 + $0x74] sm:$0xf]
    %v195 = vld [vmem:[#allocation6 + $0x78] sm:$0xf]
    %v196 = vld [vmem:[#allocation6 + $0x7c] sm:$0xf]
    %v229 = vunpack.c.l.b16 %v133
    %v230 = vunpack.c.h.b16 %v133
    %v231 = vunpack.c.l.b16 %v134
    %v232 = vunpack.c.h.b16 %v134
    %v233 = vunpack.c.l.b16 %v135
    %v234 = vunpack.c.h.b16 %v135
    %v235 = vunpack.c.l.b16 %v136
    %v236 = vunpack.c.h.b16 %v136
    %v237 = vunpack.c.l.b16 %v137
    %v238 = vunpack.c.h.b16 %v137
    %v239 = vunpack.c.l.b16 %v138
    %v240 = vunpack.c.h.b16 %v138
    %v241 = vunpack.c.l.b16 %v139
    %v242 = vunpack.c.h.b16 %v139
    %v243 = vunpack.c.l.b16 %v140
    %v244 = vunpack.c.h.b16 %v140
    %v245 = vunpack.c.l.b16 %v141
    %v246 = vunpack.c.h.b16 %v141
    %v247 = vunpack.c.l.b16 %v142
    %v248 = vunpack.c.h.b16 %v142
    %v249 = vunpack.c.l.b16 %v143
    %v250 = vunpack.c.h.b16 %v143
    %v251 = vunpack.c.l.b16 %v144
    %v252 = vunpack.c.h.b16 %v144
    %v253 = vunpack.c.l.b16 %v145
    %v254 = vunpack.c.h.b16 %v145
    %v255 = vunpack.c.l.b16 %v146
    %v256 = vunpack.c.h.b16 %v146
    %v257 = vunpack.c.l.b16 %v147
    %v258 = vunpack.c.h.b16 %v147
    %v259 = vunpack.c.l.b16 %v148
    %v260 = vunpack.c.h.b16 %v148
    %v261 = vunpack.c.l.b16 %v149
    %v262 = vunpack.c.h.b16 %v149
    %v263 = vunpack.c.l.b16 %v150
    %v264 = vunpack.c.h.b16 %v150
    %v265 = vunpack.c.l.b16 %v151
    %v266 = vunpack.c.h.b16 %v151
    %v267 = vunpack.c.l.b16 %v152
    %v268 = vunpack.c.h.b16 %v152
    %v269 = vunpack.c.l.b16 %v153
    %v270 = vunpack.c.h.b16 %v153
    %v271 = vunpack.c.l.b16 %v154
    %v272 = vunpack.c.h.b16 %v154
    %v273 = vunpack.c.l.b16 %v155
    %v274 = vunpack.c.h.b16 %v155
    %v275 = vunpack.c.l.b16 %v156
    %v276 = vunpack.c.h.b16 %v156
    %v277 = vunpack.c.l.b16 %v157
    %v278 = vunpack.c.h.b16 %v157
    %v279 = vunpack.c.l.b16 %v158
    %v280 = vunpack.c.h.b16 %v158
    %v281 = vunpack.c.l.b16 %v159
    %v282 = vunpack.c.h.b16 %v159
    %v283 = vunpack.c.l.b16 %v160
    %v284 = vunpack.c.h.b16 %v160
    %v285 = vunpack.c.l.b16 %v161
    %v286 = vunpack.c.h.b16 %v161
    %v287 = vunpack.c.l.b16 %v162
    %v288 = vunpack.c.h.b16 %v162
    %v289 = vunpack.c.l.b16 %v163
    %v290 = vunpack.c.h.b16 %v163
    %v291 = vunpack.c.l.b16 %v164
    %v292 = vunpack.c.h.b16 %v164
    %v293 = vpack.c.b16 %v231, %v229
    %v294 = vpack.c.b16 %v232, %v230
    %v295 = vpack.c.b16 %v235, %v233
    %v296 = vpack.c.b16 %v236, %v234
    %v297 = vpack.c.b16 %v239, %v237
    %v298 = vpack.c.b16 %v240, %v238
    %v299 = vpack.c.b16 %v243, %v241
    %v300 = vpack.c.b16 %v244, %v242
    %v301 = vpack.c.b16 %v247, %v245
    %v302 = vpack.c.b16 %v248, %v246
    %v303 = vpack.c.b16 %v251, %v249
    %v304 = vpack.c.b16 %v252, %v250
    %v305 = vpack.c.b16 %v255, %v253
    %v306 = vpack.c.b16 %v256, %v254
    %v307 = vpack.c.b16 %v259, %v257
    %v308 = vpack.c.b16 %v260, %v258
    %v309 = vpack.c.b16 %v263, %v261
    %v310 = vpack.c.b16 %v264, %v262
    %v311 = vpack.c.b16 %v267, %v265
    %v312 = vpack.c.b16 %v268, %v266
    %v313 = vpack.c.b16 %v271, %v269
    %v314 = vpack.c.b16 %v272, %v270
    %v315 = vpack.c.b16 %v275, %v273
    %v316 = vpack.c.b16 %v276, %v274
    %v317 = vpack.c.b16 %v279, %v277
    %v318 = vpack.c.b16 %v280, %v278
    %v319 = vpack.c.b16 %v283, %v281
    %v320 = vpack.c.b16 %v284, %v282
    %v321 = vpack.c.b16 %v287, %v285
    %v322 = vpack.c.b16 %v288, %v286
    %v323 = vpack.c.b16 %v291, %v289
    %v324 = vpack.c.b16 %v292, %v290
    %v389 = vunpack.c.l.b16 %v165
    %v390 = vunpack.c.l.b16 %v166
    %v391 = vunpack.c.l.b16 %v167
    %v392 = vunpack.c.l.b16 %v168
    %v393 = vunpack.c.l.b16 %v169
    %v394 = vunpack.c.l.b16 %v170
    %v395 = vunpack.c.l.b16 %v171
    %v396 = vunpack.c.l.b16 %v172
    %v397 = vunpack.c.l.b16 %v173
    %v398 = vunpack.c.l.b16 %v174
    %v399 = vunpack.c.l.b16 %v175
    %v400 = vunpack.c.l.b16 %v176
    %v401 = vunpack.c.l.b16 %v177
    %v402 = vunpack.c.l.b16 %v178
    %v403 = vunpack.c.l.b16 %v179
    %v404 = vunpack.c.l.b16 %v180
    %v405 = vunpack.c.l.b16 %v181
    %v406 = vunpack.c.l.b16 %v182
    %v407 = vunpack.c.l.b16 %v183
    %v408 = vunpack.c.l.b16 %v184
    %v409 = vunpack.c.l.b16 %v185
    %v410 = vunpack.c.l.b16 %v186
    %v411 = vunpack.c.l.b16 %v187
    %v412 = vunpack.c.l.b16 %v188
    %v413 = vunpack.c.l.b16 %v189
    %v414 = vunpack.c.l.b16 %v190
    %v415 = vunpack.c.l.b16 %v191
    %v416 = vunpack.c.l.b16 %v192
    %v417 = vunpack.c.l.b16 %v193
    %v418 = vunpack.c.l.b16 %v194
    %v419 = vunpack.c.l.b16 %v195
    %v420 = vunpack.c.l.b16 %v196
    %v421 = vpack.c.b16 %v390, %v389
    %v422 = vpack.c.b16 %v392, %v391
    %v423 = vpack.c.b16 %v394, %v393
    %v424 = vpack.c.b16 %v396, %v395
    %v425 = vpack.c.b16 %v398, %v397
    %v426 = vpack.c.b16 %v400, %v399
    %v427 = vpack.c.b16 %v402, %v401
    %v428 = vpack.c.b16 %v404, %v403
    %v429 = vpack.c.b16 %v406, %v405
    %v430 = vpack.c.b16 %v408, %v407
    %v431 = vpack.c.b16 %v410, %v409
    %v432 = vpack.c.b16 %v412, %v411
    %v433 = vpack.c.b16 %v414, %v413
    %v434 = vpack.c.b16 %v416, %v415
    %v435 = vpack.c.b16 %v418, %v417
    %v436 = vpack.c.b16 %v420, %v419
    %453 = vmatpush.bf16.msra.mxu0 %v428
    %454 = vmatpush.bf16.msra.mxu0 %v427
    %455 = vmatpush.bf16.msra.mxu0 %v426
    %456 = vmatpush.bf16.msra.mxu0 %v425
    %457 = vmatpush.bf16.msra.mxu0 %v424
    %458 = vmatpush.bf16.msra.mxu0 %v423
    %459 = vmatpush.bf16.msra.mxu0 %v422
    %460 = vmatpush.bf16.msra.mxu0 %v421
    %461 = vmatmul.bf16.gmra.mxu0 %v293
    %v462 = vpop.f32.mrf.mxu0
    %v463 = vadd.f32 0.0, %v462
    %v464 = vpop.f32.mrf.mxu0
    %v465 = vadd.f32 0.0, %v464
    %466 = vmatmul.bf16.gmra.mxu0 %v295
    %v467 = vpop.f32.mrf.mxu0
    %v468 = vadd.f32 0.0, %v467
    %v469 = vpop.f32.mrf.mxu0
    %v470 = vadd.f32 0.0, %v469
    %471 = vmatmul.bf16.gmra.mxu0 %v297
    %v472 = vpop.f32.mrf.mxu0
    %v473 = vadd.f32 0.0, %v472
    %v474 = vpop.f32.mrf.mxu0
    %v475 = vadd.f32 0.0, %v474
    %476 = vmatmul.bf16.gmra.mxu0 %v299
    %v477 = vpop.f32.mrf.mxu0
    %v478 = vadd.f32 0.0, %v477
    %v479 = vpop.f32.mrf.mxu0
    %v480 = vadd.f32 0.0, %v479
    %481 = vmatmul.bf16.gmra.mxu0 %v301
    %v482 = vpop.f32.mrf.mxu0
    %v483 = vadd.f32 0.0, %v482
    %v484 = vpop.f32.mrf.mxu0
    %v485 = vadd.f32 0.0, %v484
    %486 = vmatmul.bf16.gmra.mxu0 %v303
    %v487 = vpop.f32.mrf.mxu0
    %v488 = vadd.f32 0.0, %v487
    %v489 = vpop.f32.mrf.mxu0
    %v490 = vadd.f32 0.0, %v489
    %491 = vmatmul.bf16.gmra.mxu0 %v305
    %v492 = vpop.f32.mrf.mxu0
    %v493 = vadd.f32 0.0, %v492
    %v494 = vpop.f32.mrf.mxu0
    %v495 = vadd.f32 0.0, %v494
    %496 = vmatmul.bf16.gmra.mxu0 %v307
    %v497 = vpop.f32.mrf.mxu0
    %v498 = vadd.f32 0.0, %v497
    %v499 = vpop.f32.mrf.mxu0
    %v500 = vadd.f32 0.0, %v499
    %501 = vmatmul.bf16.gmra.mxu0 %v309
    %v502 = vpop.f32.mrf.mxu0
    %v503 = vadd.f32 0.0, %v502
    %v504 = vpop.f32.mrf.mxu0
    %v505 = vadd.f32 0.0, %v504
    %506 = vmatmul.bf16.gmra.mxu0 %v311
    %v507 = vpop.f32.mrf.mxu0
    %v508 = vadd.f32 0.0, %v507
    %v509 = vpop.f32.mrf.mxu0
    %v510 = vadd.f32 0.0, %v509
    %511 = vmatmul.bf16.gmra.mxu0 %v313
    %v512 = vpop.f32.mrf.mxu0
    %v513 = vadd.f32 0.0, %v512
    %v514 = vpop.f32.mrf.mxu0
    %v515 = vadd.f32 0.0, %v514
    %516 = vmatmul.bf16.gmra.mxu0 %v315
    %v517 = vpop.f32.mrf.mxu0
    %v518 = vadd.f32 0.0, %v517
    %v519 = vpop.f32.mrf.mxu0
    %v520 = vadd.f32 0.0, %v519
    %521 = vmatmul.bf16.gmra.mxu0 %v317
    %v522 = vpop.f32.mrf.mxu0
    %v523 = vadd.f32 0.0, %v522
    %v524 = vpop.f32.mrf.mxu0
    %v525 = vadd.f32 0.0, %v524
    %526 = vmatmul.bf16.gmra.mxu0 %v319
    %v527 = vpop.f32.mrf.mxu0
    %v528 = vadd.f32 0.0, %v527
    %v529 = vpop.f32.mrf.mxu0
    %v530 = vadd.f32 0.0, %v529
    %531 = vmatmul.bf16.gmra.mxu0 %v321
    %v532 = vpop.f32.mrf.mxu0
    %v533 = vadd.f32 0.0, %v532
    %v534 = vpop.f32.mrf.mxu0
    %v535 = vadd.f32 0.0, %v534
    %536 = vmatmul.bf16.gmra.mxu0 %v323
    %v537 = vpop.f32.mrf.mxu0
    %v538 = vadd.f32 0.0, %v537
    %v539 = vpop.f32.mrf.mxu0
    %v540 = vadd.f32 0.0, %v539
    %541 = vdwg.mxu0
    %542 = vmatpush.bf16.msra.mxu0 %v436
    %543 = vmatpush.bf16.msra.mxu0 %v435
    %544 = vmatpush.bf16.msra.mxu0 %v434
    %545 = vmatpush.bf16.msra.mxu0 %v433
    %546 = vmatpush.bf16.msra.mxu0 %v432
    %547 = vmatpush.bf16.msra.mxu0 %v431
    %548 = vmatpush.bf16.msra.mxu0 %v430
    %549 = vmatpush.bf16.msra.mxu0 %v429
    %550 = vmatmul.bf16.gmra.mxu0 %v294
    %v551 = vpop.f32.mrf.mxu0
    %v552 = vadd.f32 %v463, %v551
    %v553 = vpop.f32.mrf.mxu0
    %v554 = vadd.f32 %v465, %v553
    %555 = vmatmul.bf16.gmra.mxu0 %v296
    %v556 = vpop.f32.mrf.mxu0
    %v557 = vadd.f32 %v468, %v556
    %v558 = vpop.f32.mrf.mxu0
    %v559 = vadd.f32 %v470, %v558
    %560 = vmatmul.bf16.gmra.mxu0 %v298
    %v561 = vpop.f32.mrf.mxu0
    %v562 = vadd.f32 %v473, %v561
    %v563 = vpop.f32.mrf.mxu0
    %v564 = vadd.f32 %v475, %v563
    %565 = vmatmul.bf16.gmra.mxu0 %v300
    %v566 = vpop.f32.mrf.mxu0
    %v567 = vadd.f32 %v478, %v566
    %v568 = vpop.f32.mrf.mxu0
    %v569 = vadd.f32 %v480, %v568
    %570 = vmatmul.bf16.gmra.mxu0 %v302
    %v571 = vpop.f32.mrf.mxu0
    %v572 = vadd.f32 %v483, %v571
    %v573 = vpop.f32.mrf.mxu0
    %v574 = vadd.f32 %v485, %v573
    %575 = vmatmul.bf16.gmra.mxu0 %v304
    %v576 = vpop.f32.mrf.mxu0
    %v577 = vadd.f32 %v488, %v576
    %v578 = vpop.f32.mrf.mxu0
    %v579 = vadd.f32 %v490, %v578
    %580 = vmatmul.bf16.gmra.mxu0 %v306
    %v581 = vpop.f32.mrf.mxu0
    %v582 = vadd.f32 %v493, %v581
    %v583 = vpop.f32.mrf.mxu0
    %v584 = vadd.f32 %v495, %v583
    %585 = vmatmul.bf16.gmra.mxu0 %v308
    %v586 = vpop.f32.mrf.mxu0
    %v587 = vadd.f32 %v498, %v586
    %v588 = vpop.f32.mrf.mxu0
    %v589 = vadd.f32 %v500, %v588
    %590 = vmatmul.bf16.gmra.mxu0 %v310
    %v591 = vpop.f32.mrf.mxu0
    %v592 = vadd.f32 %v503, %v591
    %v593 = vpop.f32.mrf.mxu0
    %v594 = vadd.f32 %v505, %v593
    %595 = vmatmul.bf16.gmra.mxu0 %v312
    %v596 = vpop.f32.mrf.mxu0
    %v597 = vadd.f32 %v508, %v596
    %v598 = vpop.f32.mrf.mxu0
    %v599 = vadd.f32 %v510, %v598
    %600 = vmatmul.bf16.gmra.mxu0 %v314
    %v601 = vpop.f32.mrf.mxu0
    %v602 = vadd.f32 %v513, %v601
    %v603 = vpop.f32.mrf.mxu0
    %v604 = vadd.f32 %v515, %v603
    %605 = vmatmul.bf16.gmra.mxu0 %v316
    %v606 = vpop.f32.mrf.mxu0
    %v607 = vadd.f32 %v518, %v606
    %v608 = vpop.f32.mrf.mxu0
    %v609 = vadd.f32 %v520, %v608
    %610 = vmatmul.bf16.gmra.mxu0 %v318
    %v611 = vpop.f32.mrf.mxu0
    %v612 = vadd.f32 %v523, %v611
    %v613 = vpop.f32.mrf.mxu0
    %v614 = vadd.f32 %v525, %v613
    %615 = vmatmul.bf16.gmra.mxu0 %v320
    %v616 = vpop.f32.mrf.mxu0
    %v617 = vadd.f32 %v528, %v616
    %v618 = vpop.f32.mrf.mxu0
    %v619 = vadd.f32 %v530, %v618
    %620 = vmatmul.bf16.gmra.mxu0 %v322
    %v621 = vpop.f32.mrf.mxu0
    %v622 = vadd.f32 %v533, %v621
    %v623 = vpop.f32.mrf.mxu0
    %v624 = vadd.f32 %v535, %v623
    %625 = vmatmul.bf16.gmra.mxu0 %v324
    %v626 = vpop.f32.mrf.mxu0
    %v627 = vadd.f32 %v538, %v626
    %v628 = vpop.f32.mrf.mxu0
    %v629 = vadd.f32 %v540, %v628
    %630 = vdwg.mxu0
    %v631 = vadd.f32 %v101, %v552
    %v632 = vadd.f32 %v102, %v554
    %v633 = vadd.f32 %v103, %v557
    %v634 = vadd.f32 %v104, %v559
    %v635 = vadd.f32 %v105, %v562
    %v636 = vadd.f32 %v106, %v564
    %v637 = vadd.f32 %v107, %v567
    %v638 = vadd.f32 %v108, %v569
    %v639 = vadd.f32 %v109, %v572
    %v640 = vadd.f32 %v110, %v574
    %v641 = vadd.f32 %v111, %v577
    %v642 = vadd.f32 %v112, %v579
    %v643 = vadd.f32 %v113, %v582
    %v644 = vadd.f32 %v114, %v584
    %v645 = vadd.f32 %v115, %v587
    %v646 = vadd.f32 %v116, %v589
    %v647 = vadd.f32 %v117, %v592
    %v648 = vadd.f32 %v118, %v594
    %v649 = vadd.f32 %v119, %v597
    %v650 = vadd.f32 %v120, %v599
    %v651 = vadd.f32 %v121, %v602
    %v652 = vadd.f32 %v122, %v604
    %v653 = vadd.f32 %v123, %v607
    %v654 = vadd.f32 %v124, %v609
    %v655 = vadd.f32 %v125, %v612
    %v656 = vadd.f32 %v126, %v614
    %v657 = vadd.f32 %v127, %v617
    %v658 = vadd.f32 %v128, %v619
    %v659 = vadd.f32 %v129, %v622
    %v660 = vadd.f32 %v130, %v624
    %v661 = vadd.f32 %v131, %v627
    %v662 = vadd.f32 %v132, %v629
    %663 = vst [vmem:[#allocation2] sm:$0xff] %v631
    %664 = vst [vmem:[#allocation2 + $0x8] sm:$0xff] %v632
    %665 = vst [vmem:[#allocation2 + $0x10] sm:$0xff] %v633
    %666 = vst [vmem:[#allocation2 + $0x18] sm:$0xff] %v634
    %667 = vst [vmem:[#allocation2 + $0x20] sm:$0xff] %v635
    %668 = vst [vmem:[#allocation2 + $0x28] sm:$0xff] %v636
    %669 = vst [vmem:[#allocation2 + $0x30] sm:$0xff] %v637
    %670 = vst [vmem:[#allocation2 + $0x38] sm:$0xff] %v638
    %671 = vst [vmem:[#allocation2 + $0x40] sm:$0xff] %v639
    %672 = vst [vmem:[#allocation2 + $0x48] sm:$0xff] %v640
    %673 = vst [vmem:[#allocation2 + $0x50] sm:$0xff] %v641
    %674 = vst [vmem:[#allocation2 + $0x58] sm:$0xff] %v642
    %675 = vst [vmem:[#allocation2 + $0x60] sm:$0xff] %v643
    %676 = vst [vmem:[#allocation2 + $0x68] sm:$0xff] %v644
    %677 = vst [vmem:[#allocation2 + $0x70] sm:$0xff] %v645
    %678 = vst [vmem:[#allocation2 + $0x78] sm:$0xff] %v646
    %679 = vst [vmem:[#allocation2 + $0x80] sm:$0xff] %v647
    %680 = vst [vmem:[#allocation2 + $0x88] sm:$0xff] %v648
    %681 = vst [vmem:[#allocation2 + $0x90] sm:$0xff] %v649
    %682 = vst [vmem:[#allocation2 + $0x98] sm:$0xff] %v650
    %683 = vst [vmem:[#allocation2 + $0xa0] sm:$0xff] %v651
    %684 = vst [vmem:[#allocation2 + $0xa8] sm:$0xff] %v652
    %685 = vst [vmem:[#allocation2 + $0xb0] sm:$0xff] %v653
    %686 = vst [vmem:[#allocation2 + $0xb8] sm:$0xff] %v654
    %687 = vst [vmem:[#allocation2 + $0xc0] sm:$0xff] %v655
    %688 = vst [vmem:[#allocation2 + $0xc8] sm:$0xff] %v656
    %689 = vst [vmem:[#allocation2 + $0xd0] sm:$0xff] %v657
    %690 = vst [vmem:[#allocation2 + $0xd8] sm:$0xff] %v658
    %691 = vst [vmem:[#allocation2 + $0xe0] sm:$0xff] %v659
    %692 = vst [vmem:[#allocation2 + $0xe8] sm:$0xff] %v660
    %693 = vst [vmem:[#allocation2 + $0xf0] sm:$0xff] %v661
    %694 = vst [vmem:[#allocation2 + $0xf8] sm:$0xff] %v662
    // Predicated region
    $region34: #{tpu_custom_call.1} parent=1 // pred_check
      %p695 = pneg %p65
    $region35: #{tpu_custom_call.1} parent=1 // pred_check_branch
      %697 = sbr.rel (%p695) target = $region37
    $region36: #{tpu_custom_call.1} parent=1 // pred_region
      %v698 = vld [vmem:[#allocation2] sm:$0xff]
      %v699 = vld [vmem:[#allocation2 + $0x8] sm:$0xff]
      %v700 = vld [vmem:[#allocation2 + $0x10] sm:$0xff]
      %v701 = vld [vmem:[#allocation2 + $0x18] sm:$0xff]
      %v702 = vld [vmem:[#allocation2 + $0x20] sm:$0xff]
      %v703 = vld [vmem:[#allocation2 + $0x28] sm:$0xff]
      %v704 = vld [vmem:[#allocation2 + $0x30] sm:$0xff]
      %v705 = vld [vmem:[#allocation2 + $0x38] sm:$0xff]
      %v706 = vld [vmem:[#allocation2 + $0x40] sm:$0xff]
      %v707 = vld [vmem:[#allocation2 + $0x48] sm:$0xff]
      %v708 = vld [vmem:[#allocation2 + $0x50] sm:$0xff]
      %v709 = vld [vmem:[#allocation2 + $0x58] sm:$0xff]
      %v710 = vld [vmem:[#allocation2 + $0x60] sm:$0xff]
      %v711 = vld [vmem:[#allocation2 + $0x68] sm:$0xff]
      %v712 = vld [vmem:[#allocation2 + $0x70] sm:$0xff]
      %v713 = vld [vmem:[#allocation2 + $0x78] sm:$0xff]
      %v714 = vld [vmem:[#allocation2 + $0x80] sm:$0xff]
      %v715 = vld [vmem:[#allocation2 + $0x88] sm:$0xff]
      %v716 = vld [vmem:[#allocation2 + $0x90] sm:$0xff]
      %v717 = vld [vmem:[#allocation2 + $0x98] sm:$0xff]
      %v718 = vld [vmem:[#allocation2 + $0xa0] sm:$0xff]
      %v719 = vld [vmem:[#allocation2 + $0xa8] sm:$0xff]
      %v720 = vld [vmem:[#allocation2 + $0xb0] sm:$0xff]
      %v721 = vld [vmem:[#allocation2 + $0xb8] sm:$0xff]
      %v722 = vld [vmem:[#allocation2 + $0xc0] sm:$0xff]
      %v723 = vld [vmem:[#allocation2 + $0xc8] sm:$0xff]
      %v724 = vld [vmem:[#allocation2 + $0xd0] sm:$0xff]
      %v725 = vld [vmem:[#allocation2 + $0xd8] sm:$0xff]
      %v726 = vld [vmem:[#allocation2 + $0xe0] sm:$0xff]
      %v727 = vld [vmem:[#allocation2 + $0xe8] sm:$0xff]
      %v728 = vld [vmem:[#allocation2 + $0xf0] sm:$0xff]
      %v729 = vld [vmem:[#allocation2 + $0xf8] sm:$0xff]
      %v730 = vpack.c.bf16 %v699, %v698
      %v731 = vpack.c.bf16 %v701, %v700
      %v732 = vpack.c.bf16 %v703, %v702
      %v733 = vpack.c.bf16 %v705, %v704
      %v734 = vpack.c.bf16 %v707, %v706
      %v735 = vpack.c.bf16 %v709, %v708
      %v736 = vpack.c.bf16 %v711, %v710
      %v737 = vpack.c.bf16 %v713, %v712
      %v738 = vpack.c.bf16 %v715, %v714
      %v739 = vpack.c.bf16 %v717, %v716
      %v740 = vpack.c.bf16 %v719, %v718
      %v741 = vpack.c.bf16 %v721, %v720
      %v742 = vpack.c.bf16 %v723, %v722
      %v743 = vpack.c.bf16 %v725, %v724
      %v744 = vpack.c.bf16 %v727, %v726
      %v745 = vpack.c.bf16 %v729, %v728
      %v746 = vld [vmem:[#allocation8] sm:$0xf]
      %v747 = vld [vmem:[#allocation8 + $0x4] sm:$0xf]
      %v748 = vld [vmem:[#allocation8 + $0x8] sm:$0xf]
      %v749 = vld [vmem:[#allocation8 + $0xc] sm:$0xf]
      %v750 = vld [vmem:[#allocation8 + $0x10] sm:$0xf]
      %v751 = vld [vmem:[#allocation8 + $0x14] sm:$0xf]
      %v752 = vld [vmem:[#allocation8 + $0x18] sm:$0xf]
      %v753 = vld [vmem:[#allocation8 + $0x1c] sm:$0xf]
      %v754 = vld [vmem:[#allocation8 + $0x20] sm:$0xf]
      %v755 = vld [vmem:[#allocation8 + $0x24] sm:$0xf]
      %v756 = vld [vmem:[#allocation8 + $0x28] sm:$0xf]
      %v757 = vld [vmem:[#allocation8 + $0x2c] sm:$0xf]
      %v758 = vld [vmem:[#allocation8 + $0x30] sm:$0xf]
      %v759 = vld [vmem:[#allocation8 + $0x34] sm:$0xf]
      %v760 = vld [vmem:[#allocation8 + $0x38] sm:$0xf]
      %v761 = vld [vmem:[#allocation8 + $0x3c] sm:$0xf]
      %v762 = vld [vmem:[%s3] sm:$0x1]
      %v764 = vperm.slane %v762, 0
      %v782 = vunpack.c.l.b16 %v746
      %v783 = vunpack.c.l.b16 %v747
      %v784 = vunpack.c.l.b16 %v748
      %v785 = vunpack.c.l.b16 %v749
      %v786 = vunpack.c.l.b16 %v750
      %v787 = vunpack.c.l.b16 %v751
      %v788 = vunpack.c.l.b16 %v752
      %v789 = vunpack.c.l.b16 %v753
      %v790 = vunpack.c.l.b16 %v754
      %v791 = vunpack.c.l.b16 %v755
      %v792 = vunpack.c.l.b16 %v756
      %v793 = vunpack.c.l.b16 %v757
      %v794 = vunpack.c.l.b16 %v758
      %v795 = vunpack.c.l.b16 %v759
      %v796 = vunpack.c.l.b16 %v760
      %v797 = vunpack.c.l.b16 %v761
      %v798 = vpack.c.b16 %v783, %v782
      %v799 = vpack.c.b16 %v785, %v784
      %v800 = vpack.c.b16 %v787, %v786
      %v801 = vpack.c.b16 %v789, %v788
      %v802 = vpack.c.b16 %v791, %v790
      %v803 = vpack.c.b16 %v793, %v792
      %v804 = vpack.c.b16 %v795, %v794
      %v805 = vpack.c.b16 %v797, %v796
      %814 = vmatpush.bf16.msra.mxu0 %v805
      %815 = vmatpush.bf16.msra.mxu0 %v804
      %816 = vmatpush.bf16.msra.mxu0 %v803
      %817 = vmatpush.bf16.msra.mxu0 %v802
      %818 = vmatpush.bf16.msra.mxu0 %v801
      %819 = vmatpush.bf16.msra.mxu0 %v800
      %820 = vmatpush.bf16.msra.mxu0 %v799
      %821 = vmatpush.bf16.msra.mxu0 %v798
      %822 = vmatmul.bf16.gmra.mxu0 %v730
      %v823 = vpop.f32.mrf.mxu0
      %v824 = vadd.f32 %v764, %v823
      %v825 = vpop.f32.mrf.mxu0
      %v826 = vadd.f32 %v764, %v825
      %827 = vmatmul.bf16.gmra.mxu0 %v731
      %v828 = vpop.f32.mrf.mxu0
      %v829 = vadd.f32 %v764, %v828
      %v830 = vpop.f32.mrf.mxu0
      %v831 = vadd.f32 %v764, %v830
      %832 = vmatmul.bf16.gmra.mxu0 %v732
      %v833 = vpop.f32.mrf.mxu0
      %v834 = vadd.f32 %v764, %v833
      %v835 = vpop.f32.mrf.mxu0
      %v836 = vadd.f32 %v764, %v835
      %837 = vmatmul.bf16.gmra.mxu0 %v733
      %v838 = vpop.f32.mrf.mxu0
      %v839 = vadd.f32 %v764, %v838
      %v840 = vpop.f32.mrf.mxu0
      %v841 = vadd.f32 %v764, %v840
      %842 = vmatmul.bf16.gmra.mxu0 %v734
      %v843 = vpop.f32.mrf.mxu0
      %v844 = vadd.f32 %v764, %v843
      %v845 = vpop.f32.mrf.mxu0
      %v846 = vadd.f32 %v764, %v845
      %847 = vmatmul.bf16.gmra.mxu0 %v735
      %v848 = vpop.f32.mrf.mxu0
      %v849 = vadd.f32 %v764, %v848
      %v850 = vpop.f32.mrf.mxu0
      %v851 = vadd.f32 %v764, %v850
      %852 = vmatmul.bf16.gmra.mxu0 %v736
      %v853 = vpop.f32.mrf.mxu0
      %v854 = vadd.f32 %v764, %v853
      %v855 = vpop.f32.mrf.mxu0
      %v856 = vadd.f32 %v764, %v855
      %857 = vmatmul.bf16.gmra.mxu0 %v737
      %v858 = vpop.f32.mrf.mxu0
      %v859 = vadd.f32 %v764, %v858
      %v860 = vpop.f32.mrf.mxu0
      %v861 = vadd.f32 %v764, %v860
      %862 = vmatmul.bf16.gmra.mxu0 %v738
      %v863 = vpop.f32.mrf.mxu0
      %v864 = vadd.f32 %v764, %v863
      %v865 = vpop.f32.mrf.mxu0
      %v866 = vadd.f32 %v764, %v865
      %867 = vmatmul.bf16.gmra.mxu0 %v739
      %v868 = vpop.f32.mrf.mxu0
      %v869 = vadd.f32 %v764, %v868
      %v870 = vpop.f32.mrf.mxu0
      %v871 = vadd.f32 %v764, %v870
      %872 = vmatmul.bf16.gmra.mxu0 %v740
      %v873 = vpop.f32.mrf.mxu0
      %v874 = vadd.f32 %v764, %v873
      %v875 = vpop.f32.mrf.mxu0
      %v876 = vadd.f32 %v764, %v875
      %877 = vmatmul.bf16.gmra.mxu0 %v741
      %v878 = vpop.f32.mrf.mxu0
      %v879 = vadd.f32 %v764, %v878
      %v880 = vpop.f32.mrf.mxu0
      %v881 = vadd.f32 %v764, %v880
      %882 = vmatmul.bf16.gmra.mxu0 %v742
      %v883 = vpop.f32.mrf.mxu0
      %v884 = vadd.f32 %v764, %v883
      %v885 = vpop.f32.mrf.mxu0
      %v886 = vadd.f32 %v764, %v885
      %887 = vmatmul.bf16.gmra.mxu0 %v743
      %v888 = vpop.f32.mrf.mxu0
      %v889 = vadd.f32 %v764, %v888
      %v890 = vpop.f32.mrf.mxu0
      %v891 = vadd.f32 %v764, %v890
      %892 = vmatmul.bf16.gmra.mxu0 %v744
      %v893 = vpop.f32.mrf.mxu0
      %v894 = vadd.f32 %v764, %v893
      %v895 = vpop.f32.mrf.mxu0
      %v896 = vadd.f32 %v764, %v895
      %897 = vmatmul.bf16.gmra.mxu0 %v745
      %v898 = vpop.f32.mrf.mxu0
      %v899 = vadd.f32 %v764, %v898
      %v900 = vpop.f32.mrf.mxu0
      %v901 = vadd.f32 %v764, %v900
      %902 = vdwg.mxu0
      %v903 = vmax.f32 %v824, 0.0
      %v904 = vmax.f32 %v826, 0.0
      %v905 = vmax.f32 %v829, 0.0
      %v906 = vmax.f32 %v831, 0.0
      %v907 = vmax.f32 %v834, 0.0
      %v908 = vmax.f32 %v836, 0.0
      %v909 = vmax.f32 %v839, 0.0
      %v910 = vmax.f32 %v841, 0.0
      %v911 = vmax.f32 %v844, 0.0
      %v912 = vmax.f32 %v846, 0.0
      %v913 = vmax.f32 %v849, 0.0
      %v914 = vmax.f32 %v851, 0.0
      %v915 = vmax.f32 %v854, 0.0
      %v916 = vmax.f32 %v856, 0.0
      %v917 = vmax.f32 %v859, 0.0
      %v918 = vmax.f32 %v861, 0.0
      %v919 = vmax.f32 %v864, 0.0
      %v920 = vmax.f32 %v866, 0.0
      %v921 = vmax.f32 %v869, 0.0
      %v922 = vmax.f32 %v871, 0.0
      %v923 = vmax.f32 %v874, 0.0
      %v924 = vmax.f32 %v876, 0.0
      %v925 = vmax.f32 %v879, 0.0
      %v926 = vmax.f32 %v881, 0.0
      %v927 = vmax.f32 %v884, 0.0
      %v928 = vmax.f32 %v886, 0.0
      %v929 = vmax.f32 %v889, 0.0
      %v930 = vmax.f32 %v891, 0.0
      %v931 = vmax.f32 %v894, 0.0
      %v932 = vmax.f32 %v896, 0.0
      %v933 = vmax.f32 %v899, 0.0
      %v934 = vmax.f32 %v901, 0.0
      %v935 = vpack.c.bf16 %v903, %v903
      %v936 = vpack.c.bf16 %v904, %v904
      %v937 = vpack.c.bf16 %v905, %v905
      %v938 = vpack.c.bf16 %v906, %v906
      %v939 = vpack.c.bf16 %v907, %v907
      %v940 = vpack.c.bf16 %v908, %v908
      %v941 = vpack.c.bf16 %v909, %v909
      %v942 = vpack.c.bf16 %v910, %v910
      %v943 = vpack.c.bf16 %v911, %v911
      %v944 = vpack.c.bf16 %v912, %v912
      %v945 = vpack.c.bf16 %v913, %v913
      %v946 = vpack.c.bf16 %v914, %v914
      %v947 = vpack.c.bf16 %v915, %v915
      %v948 = vpack.c.bf16 %v916, %v916
      %v949 = vpack.c.bf16 %v917, %v917
      %v950 = vpack.c.bf16 %v918, %v918
      %v951 = vpack.c.bf16 %v919, %v919
      %v952 = vpack.c.bf16 %v920, %v920
      %v953 = vpack.c.bf16 %v921, %v921
      %v954 = vpack.c.bf16 %v922, %v922
      %v955 = vpack.c.bf16 %v923, %v923
      %v956 = vpack.c.bf16 %v924, %v924
      %v957 = vpack.c.bf16 %v925, %v925
      %v958 = vpack.c.bf16 %v926, %v926
      %v959 = vpack.c.bf16 %v927, %v927
      %v960 = vpack.c.bf16 %v928, %v928
      %v961 = vpack.c.bf16 %v929, %v929
      %v962 = vpack.c.bf16 %v930, %v930
      %v963 = vpack.c.bf16 %v931, %v931
      %v964 = vpack.c.bf16 %v932, %v932
      %v965 = vpack.c.bf16 %v933, %v933
      %v966 = vpack.c.bf16 %v934, %v934
      %967 = vst [vmem:[#allocation9] sm:$0xf] %v935
      %968 = vst [vmem:[#allocation9 + $0x4] sm:$0xf] %v936
      %969 = vst [vmem:[#allocation9 + $0x8] sm:$0xf] %v937
      %970 = vst [vmem:[#allocation9 + $0xc] sm:$0xf] %v938
      %971 = vst [vmem:[#allocation9 + $0x10] sm:$0xf] %v939
      %972 = vst [vmem:[#allocation9 + $0x14] sm:$0xf] %v940
      %973 = vst [vmem:[#allocation9 + $0x18] sm:$0xf] %v941
      %974 = vst [vmem:[#allocation9 + $0x1c] sm:$0xf] %v942
      %975 = vst [vmem:[#allocation9 + $0x20] sm:$0xf] %v943
      %976 = vst [vmem:[#allocation9 + $0x24] sm:$0xf] %v944
      %977 = vst [vmem:[#allocation9 + $0x28] sm:$0xf] %v945
      %978 = vst [vmem:[#allocation9 + $0x2c] sm:$0xf] %v946
      %979 = vst [vmem:[#allocation9 + $0x30] sm:$0xf] %v947
      %980 = vst [vmem:[#allocation9 + $0x34] sm:$0xf] %v948
      %981 = vst [vmem:[#allocation9 + $0x38] sm:$0xf] %v949
      %982 = vst [vmem:[#allocation9 + $0x3c] sm:$0xf] %v950
      %983 = vst [vmem:[#allocation9 + $0x40] sm:$0xf] %v951
      %984 = vst [vmem:[#allocation9 + $0x44] sm:$0xf] %v952
      %985 = vst [vmem:[#allocation9 + $0x48] sm:$0xf] %v953
      %986 = vst [vmem:[#allocation9 + $0x4c] sm:$0xf] %v954
      %987 = vst [vmem:[#allocation9 + $0x50] sm:$0xf] %v955
      %988 = vst [vmem:[#allocation9 + $0x54] sm:$0xf] %v956
      %989 = vst [vmem:[#allocation9 + $0x58] sm:$0xf] %v957
      %990 = vst [vmem:[#allocation9 + $0x5c] sm:$0xf] %v958
      %991 = vst [vmem:[#allocation9 + $0x60] sm:$0xf] %v959
      %992 = vst [vmem:[#allocation9 + $0x64] sm:$0xf] %v960
      %993 = vst [vmem:[#allocation9 + $0x68] sm:$0xf] %v961
      %994 = vst [vmem:[#allocation9 + $0x6c] sm:$0xf] %v962
      %995 = vst [vmem:[#allocation9 + $0x70] sm:$0xf] %v963
      %996 = vst [vmem:[#allocation9 + $0x74] sm:$0xf] %v964
      %997 = vst [vmem:[#allocation9 + $0x78] sm:$0xf] %v965
      %998 = vst [vmem:[#allocation9 + $0x7c] sm:$0xf] %v966
    $region37: #{tpu_custom_call.1} parent=1 // pred_fallthru
      _
    // Predicated region
    $region38: #{tpu_custom_call.1} parent=1 // pred_check
      _
    $region39: #{tpu_custom_call.1} parent=1 // pred_check_branch
      %1000 = sbr.rel (0) target = $region41
    $region40: #{tpu_custom_call.1} parent=1 // pred_region
      %1002 = vsyncadd [#allocation5], 0
      %s1003 = sshll.u32 [#allocation9], 4
      %s1004 = int_to_ptr.vmem [resolvable:$true] %s1003
      %s1005 = sshll.u32 %s4, 4
      %s1006 = int_to_ptr.hbm [resolvable:$true] %s1005
      %1011 = dma.vmem_to_hbm [thread:$0]  %s1004, 2048, %s1006, [#allocation5], 64, 64, 4
    $region41: #{tpu_custom_call.1} parent=1 // pred_fallthru
      _
    // Predicated region
    $region42: #{tpu_custom_call.1} parent=1 // pred_check
      _
    $region43: #{tpu_custom_call.1} parent=1 // pred_check_branch
      %1013 = sbr.rel (0) target = $region45
    $region44: #{tpu_custom_call.1} parent=1 // pred_region
      %1015 = dma.done [#allocation5], 2048
    $region45: #{tpu_custom_call.1} parent=1 // pred_fallthru
      _
    %1016 = vsyncpa [#allocation4], 1
    %1017 = vsyncpa [#allocation7], 1
    %1018 = vsyncpa [#allocation5], 1

</llo_original>
